<compile_context>
chip_gen: v6e
topology: v6e:2x2x1
jax: 0.10.0
libtpu: 0.0.40
codegen_flags: <defaults>
</compile_context>

<pallas_src>
import jax
import jax.numpy as jnp
from jax.experimental import pallas as pl
from jax.experimental.pallas import tpu as pltpu


def _bias_add_kernel(x_ref, b_ref, o_ref):
    # b_ref is either (tr, 1) (per-row bias, broadcast along lanes) or
    # (1, tc) (per-lane bias, broadcast along sublanes); the same body
    # handles both via jnp broadcasting.  astype is a no-op when the input
    # already has the (promoted) output dtype.
    o_ref[...] = x_ref[...].astype(o_ref.dtype) + b_ref[...]


def _pick_tiles(rows, cols, itemsize, target_bytes=2 << 20):
    """Pick (row_tile, col_tile) for a (rows, cols) slab, ~target_bytes/tile."""
    lane = 128
    # Packed dtypes (bf16/int8) travel in sublane groups; keep rows a multiple.
    sub = max(8, 32 // itemsize)

    # Lane (last-dim) tile: full extent when `sub` rows of it fit the budget,
    # otherwise the largest multiple of 128 that does.
    if cols * sub * itemsize <= target_bytes:
        tc = cols                    # full extent is always layout-legal
    else:
        tc_cap = max(lane, (target_bytes // (sub * itemsize)) // lane * lane)
        tc = min(cols, tc_cap)
        tc = max(lane, (tc // lane) * lane)   # multiple of 128

    # Sublane (second-to-last dim) tile: multiple of `sub`, ~target_bytes total.
    rows_fit = max(sub, target_bytes // max(1, tc * itemsize))
    tr = max(sub, (rows_fit // sub) * sub)
    if tr >= rows:
        tr = rows                    # small slab: single full-extent row block
    return tr, tc


def learnable_bias_forward(x_nchw: jax.Array, bias_1c11: jax.Array) -> jax.Array:
    """x_nchw: (N, C, H, W); bias_1c11: (1, C, 1, 1). Returns (N, C, H, W)."""
    N, C, H, W = x_nchw.shape
    HW = H * W
    out_dtype = jnp.result_type(x_nchw.dtype, bias_1c11.dtype)
    itemsize = jnp.dtype(out_dtype).itemsize

    if HW % 128 == 0:
        # Lane-dense rows: (N*C, H*W) slab, bias column per (n, c) row.
        rows, cols = N * C, HW
        x2d = x_nchw.reshape(rows, cols)                       # zero-copy view
        b2d = (jnp.broadcast_to(bias_1c11.reshape(1, C), (N, C))
               .reshape(rows, 1).astype(out_dtype))            # tiny (N*C,1)
        tr, tc = _pick_tiles(rows, cols, itemsize)
        b_spec = pl.BlockSpec((tr, 1), lambda i, j: (i, 0))
    else:
        # Fallback: maximize lane density with a (N, C*H*W) slab; bias becomes
        # a (1, C*H*W) row broadcast over the batch (sublane) axis.
        rows, cols = N, C * HW
        x2d = x_nchw.reshape(rows, cols)                       # zero-copy view
        b2d = (jnp.broadcast_to(bias_1c11.reshape(C, 1), (C, HW))
               .reshape(1, cols).astype(out_dtype))            # small vs x
        tr, tc = _pick_tiles(rows, cols, itemsize)
        b_spec = pl.BlockSpec((1, tc), lambda i, j: (0, j))

    grid = (pl.cdiv(rows, tr), pl.cdiv(cols, tc))

    out2d = pl.pallas_call(
        _bias_add_kernel,
        out_shape=jax.ShapeDtypeStruct((rows, cols), out_dtype),
        grid_spec=pltpu.PrefetchScalarGridSpec(
            num_scalar_prefetch=0,
            grid=grid,
            in_specs=[
                pl.BlockSpec((tr, tc), lambda i, j: (i, j)),
                b_spec,
            ],
            out_specs=pl.BlockSpec((tr, tc), lambda i, j: (i, j)),
        ),
        compiler_params=pltpu.CompilerParams(
            # Pure elementwise map: both grid axes independent -> megacore
            # (v7x's two TensorCores) can shard the grid.
            dimension_semantics=("parallel", "parallel"),
        ),
    )(x2d, b2d)

    # Zero-copy reshape back to NCHW.
    return out2d.reshape(N, C, H, W)


if __name__ == "__main__":
    key = jax.random.PRNGKey(0)
    kx, kb, kx2 = jax.random.split(key, 3)

    # Primary shape (matches module usage; exercises the lane-dense path).
    N, C, H, W = 2, 4, 16, 16
    x = jax.random.normal(kx, (N, C, H, W), dtype=jnp.float32)
    # Module __init__ uses zeros(1, C, 1, 1); use a nonzero bias so the
    # broadcast path is actually exercised.
    bias = jax.random.normal(kb, (1, C, 1, 1), dtype=jnp.float32) * 0.1

    out = jax.block_until_ready(learnable_bias_forward(x, bias))
    ref = x + jnp.broadcast_to(bias, x.shape)
    assert out.shape == x.shape and out.dtype == x.dtype
    assert jnp.allclose(out, ref, atol=1e-6, rtol=1e-6), "mismatch (primary path)"

    # Secondary shape with H*W not a multiple of 128 (exercises the fallback
    # lane-dense-row layout, e.g. 7x7 late-stage ResNet feature maps).
    x2 = jax.random.normal(kx2, (2, 4, 7, 7), dtype=jnp.float32)
    out2 = jax.block_until_ready(learnable_bias_forward(x2, bias))
    ref2 = x2 + jnp.broadcast_to(bias, x2.shape)
    assert jnp.allclose(out2, ref2, atol=1e-6, rtol=1e-6), "mismatch (fallback path)"

    print("KERNEL_OK")
</pallas_src>

<mosaic_0001>
module attributes {stable_mosaic.version = 11 : i64} {
  func.func @_bias_add_kernel(%arg0: i32, %arg1: i32, %arg2: memref<8x256xf32, #tpu.memory_space<vmem>>, %arg3: memref<8x1xf32, #tpu.memory_space<vmem>>, %arg4: memref<8x256xf32, #tpu.memory_space<vmem>>) attributes {dimension_semantics = [#tpu.dimension_semantics<parallel>, #tpu.dimension_semantics<parallel>], iteration_bounds = array<i64: 1, 1>, scalar_prefetch = 0 : i64, scratch_operands = 0 : i64, tpu.core_type = #tpu.core_type<tc>, window_params = [{transform_indices = @transform_0, window_bounds = array<i64: 8, 256>}, {transform_indices = @transform_1, window_bounds = array<i64: 8, 1>}, {transform_indices = @transform_2, window_bounds = array<i64: 8, 256>}]} {
    %c0 = arith.constant 0 : index
    %c0_0 = arith.constant 0 : index
    %0 = vector.load %arg2[%c0, %c0_0] : memref<8x256xf32, #tpu.memory_space<vmem>>, vector<8x256xf32>
    %c0_1 = arith.constant 0 : index
    %c0_2 = arith.constant 0 : index
    %1 = vector.load %arg3[%c0_1, %c0_2] : memref<8x1xf32, #tpu.memory_space<vmem>>, vector<8x1xf32>
    %2 = vector.broadcast %1 : vector<8x1xf32> to vector<8x256xf32>
    %3 = arith.addf %0, %2 : vector<8x256xf32>
    %c0_3 = arith.constant 0 : index
    %c0_4 = arith.constant 0 : index
    %4 = vector.load %arg4[%c0_3, %c0_4] : memref<8x256xf32, #tpu.memory_space<vmem>>, vector<8x256xf32>
    tpu.vector_store %arg4[%c0_3, %c0_4], %3 {strides = array<i32>} : memref<8x256xf32, #tpu.memory_space<vmem>>, vector<8x256xf32>,
    return
  }
  func.func @transform_0(%arg0: i32, %arg1: i32) -> (i32, i32) {
    %c0_i32 = arith.constant 0 : i32
    return %arg0, %arg1 : i32, i32
  }
  func.func @transform_1(%arg0: i32, %arg1: i32) -> (i32, i32) {
    %c0_i32 = arith.constant 0 : i32
    %c0_i32_0 = arith.constant 0 : i32
    return %arg0, %c0_i32 : i32, i32
  }
  func.func @transform_2(%arg0: i32, %arg1: i32) -> (i32, i32) {
    %c0_i32 = arith.constant 0 : i32
    return %arg0, %arg1 : i32, i32
  }
}

</mosaic_0001>

<llo_original>
// kernel: tpu_custom_call.1
$region0: #{tpu_custom_call.1}
  #allocation0 [shape = 'u32[]', space=smem, size = 0x4, offset = 0x4, fixed_abs, tag = 'smem constant byte address 0x4 - core index']
  #allocation1 [shape = 'u32[144,128]{1,0:T(1,128)}', space=vmem, size = 0x12000, scoped, tag = 'internal scratch']
  %s0 = inlined_call_operand.hbm [shape: f32[8,256], index: 0, kind: input, shape index: {}]
  %s1 = inlined_call_operand.vmem [shape: f32[8,1], index: 1, kind: input, shape index: {}]
  %s2 = inlined_call_operand.hbm [shape: f32[8,256], index: 2, kind: output, shape index: {}]
  %s3 = sld [smem:[#allocation0]]
  $region22: #{tpu_custom_call.1} parent=0
    _
  %s5 = ssub.s32 1, %s3
  %s6 = scalar_select 0, %s5, %s3
  $region1: #{tpu_custom_call.1} parent=0
    #allocation2 [shape = 'u8[8192]{0}', space=vmem, size = 0x2000, scoped, tag = 'input window, operand 0, single buffered']
    #allocation3 [shape = 's32[1]{0}', space=sflag, size = 0x4, scoped, tag = 'scoped memory for tpu_custom_call.1']
    #allocation4 [shape = 's32[1]{0}', space=sflag, size = 0x4, scoped, tag = 'scoped memory for tpu_custom_call.1']
    #allocation5 [shape = 'u8[8192]{0}', space=vmem, size = 0x2000, scoped, tag = 'output window, operand 0, single buffered']
    %7 = vsyncpa [#allocation3], 0
    %8 = vsyncpa [#allocation4], 0
    // Predicated region
    $region2: #{tpu_custom_call.1} parent=1 // pred_check
      _
    $region3: #{tpu_custom_call.1} parent=1 // pred_check_branch
      %10 = sbr.rel (0) target = $region5
    $region4: #{tpu_custom_call.1} parent=1 // pred_region
      %s12 = ssub.s32 256, 256
      %13 = vsyncadd [#allocation3], %s12
      %s15 = sshll.u32 [#allocation2], 4
      %s16 = int_to_ptr.vmem [resolvable:$true] %s15
      %18 = dma.hbm_to_vmem [thread:$0]  %s0, 256, %s16, [#allocation3]
    $region5: #{tpu_custom_call.1} parent=1 // pred_fallthru
      _
    // Predicated region
    $region6: #{tpu_custom_call.1} parent=1 // pred_check
      _
    $region7: #{tpu_custom_call.1} parent=1 // pred_check_branch
      %20 = sbr.rel (0) target = $region9
    $region8: #{tpu_custom_call.1} parent=1 // pred_region
      _
    $region9: #{tpu_custom_call.1} parent=1 // pred_fallthru
      _
    // Predicated region
    $region10: #{tpu_custom_call.1} parent=1 // pred_check
      _
    $region11: #{tpu_custom_call.1} parent=1 // pred_check_branch
      %22 = sbr.rel (0) target = $region13
    $region12: #{tpu_custom_call.1} parent=1 // pred_region
      %23 = dma.done [#allocation3], 256
    $region13: #{tpu_custom_call.1} parent=1 // pred_fallthru
      _
    %v24 = vld [vmem:[#allocation2] sm:$0xff]
    %v25 = vld [vmem:[#allocation2 + $0x8] sm:$0xff]
    %v26 = vld [vmem:[%s1] sm:$0xff]
    %28 = vset.pattern.permute.xlu0 0
    %29 = vperm.xlu0 %28, %v26
    %v30 = vpop.permute.xlu0 %29
    %v32 = vadd.f32 %v24, %v30
    %v33 = vadd.f32 %v25, %v30
    %34 = vst [vmem:[#allocation5] sm:$0xff] %v32
    %35 = vst [vmem:[#allocation5 + $0x8] sm:$0xff] %v33
    // Predicated region
    $region14: #{tpu_custom_call.1} parent=1 // pred_check
      _
    $region15: #{tpu_custom_call.1} parent=1 // pred_check_branch
      %37 = sbr.rel (0) target = $region17
    $region16: #{tpu_custom_call.1} parent=1 // pred_region
      %s39 = ssub.s32 256, 256
      %40 = vsyncadd [#allocation4], %s39
      %s42 = sshll.u32 [#allocation5], 4
      %s43 = int_to_ptr.vmem [resolvable:$true] %s42
      %45 = dma.vmem_to_hbm [thread:$0]  %s43, 256, %s2, [#allocation4]
    $region17: #{tpu_custom_call.1} parent=1 // pred_fallthru
      _
    // Predicated region
    $region18: #{tpu_custom_call.1} parent=1 // pred_check
      _
    $region19: #{tpu_custom_call.1} parent=1 // pred_check_branch
      %47 = sbr.rel (0) target = $region21
    $region20: #{tpu_custom_call.1} parent=1 // pred_region
      %48 = dma.done [#allocation4], 256
    $region21: #{tpu_custom_call.1} parent=1 // pred_fallthru
      _
    %49 = vsyncpa [#allocation3], 1
    %50 = vsyncpa [#allocation4], 1

</llo_original>
